<compile_context>
chip_gen: v5e
topology: v5e:2x2
jax: 0.10.0
libtpu: 0.0.40
codegen_flags: <defaults>
</compile_context>

<pallas_src>
import functools
import math

import jax
import jax.numpy as jnp
from jax.experimental import pallas as pl
from jax.experimental.pallas import tpu as pltpu


# ----------------------------------------------------------------------------
# Hardware-aware budgets
# ----------------------------------------------------------------------------

def _tpu_hw_budget():
    """Returns (vmem_budget_bytes, vmem_limit_bytes_or_None, tensorcores)."""
    try:
        kind = jax.devices()[0].device_kind.lower()
    except Exception:
        kind = ""
    if "v7" in kind:                                   # 64 MiB VMEM, 2 TC/chip
        return 44 << 20, 44 << 20, 2
    if "v6" in kind:                                   # 128 MiB VMEM, 1 TC
        return 96 << 20, 96 << 20, 1
    if "v5 lite" in kind or "v5e" in kind or "v5lite" in kind:
        return 96 << 20, 96 << 20, 1                   # 128 MiB VMEM, 1 TC
    if "v5" in kind or "v4" in kind:                   # v5p / v4: megacore
        return 96 << 20, 96 << 20, 2
    # Unknown chip: stay under the smallest default scoped-VMEM limit.
    return 12 << 20, None, 1


def _pick_fold(n_rows, s0, max_fold=16):
    """Smallest k dividing n_rows with k*s0 a multiple of 128 lanes (else 1)."""
    if s0 % 128 == 0 or n_rows <= 1:
        return 1
    for k in range(2, max_fold + 1):
        if n_rows % k == 0 and (k * s0) % 128 == 0:
            return k
    return 1


def _pick_row_tile(n_rows, lane_width, itemsize, budget_bytes):
    """Row tile for the tiled path with explicit VMEM accounting.

    Accounts for double-buffered input & output blocks plus ~2 f32 working rows
    per tile row, and for the resident (few, lane_width) f32 blocks
    (x0 / scale / shift / accumulators).  Sublane step is dtype-aware
    (8 rows for f32, 16 for bf16, 32 for int8/fp8).
    """
    step = 8 * max(1, 4 // max(1, itemsize))
    if n_rows <= step:
        return n_rows
    per_row = lane_width * (2 * itemsize + 2 * itemsize + 8)
    resident = lane_width * 4 * 40 + (256 << 10)
    usable = max(0, int(budget_bytes * 0.75) - resident)
    tile = (usable // per_row // step) * step
    cap = max(step, (n_rows // step) * step)
    return max(step, min(tile, cap))


# ----------------------------------------------------------------------------
# Kernels
# ----------------------------------------------------------------------------

def _bn_fused_kernel(x_ref, w_ref, b_ref, o_ref, *, eps, fold, s0, n_total):
    """Single-block path: whole (R2, S2) slab resident in VMEM.

    Exact two-pass (centered) variance, matching the PyTorch formula.  Each
    pass re-reads the resident VMEM block instead of keeping a long-lived f32
    copy + diff temporary, and the output is folded to one mul + one add.
    The per-channel total across the `fold` lane replicas is a sum of lane
    rotations (pltpu.roll, XLU) which simultaneously broadcasts the result
    back to every replica position.
    """
    inv_n = 1.0 / float(n_total)

    def replica_allreduce(v):  # (1, S2) -> (1, S2): per-channel total, tiled
        if fold == 1:
            return v
        tot = v
        for j in range(1, fold):
            tot = tot + pltpu.roll(v, shift=j * s0, axis=1)
        return tot

    # Pass 1: mean.
    col_sum = jnp.sum(x_ref[...].astype(jnp.float32), axis=0, keepdims=True)
    mean = replica_allreduce(col_sum) * inv_n                       # (1, S2)

    # Pass 2: centered variance (PyTorch two-pass formula).
    d = x_ref[...].astype(jnp.float32) - mean
    var = replica_allreduce(jnp.sum(d * d, axis=0, keepdims=True)) * inv_n

    inv_std = jax.lax.rsqrt(var + eps)                              # EUP
    scale = w_ref[...] * inv_std                                    # (1, S2)
    shift = b_ref[...] - mean * scale                               # (1, S2)
    o_ref[...] = (x_ref[...].astype(jnp.float32) * scale + shift).astype(o_ref.dtype)


def _stats_kernel(x_ref, x0_ref, sum_ref, sq_ref, *, tile_r, n_rows, need_mask):
    """Grid reduction over row tiles: shifted per-lane sum and sum of squares.

    Shift reference = row 0 of the slab (resident (1, S2) block), which removes
    the E[x^2]-mean^2 cancellation of raw moments.  Output blocks are per-core
    f32 accumulators (constant block index along the 'arbitrary' axis), padded
    to 8 sublanes to keep layouts aligned.
    """
    i = pl.program_id(1)

    @pl.when(i == 0)
    def _():
        sum_ref[...] = jnp.zeros_like(sum_ref)
        sq_ref[...] = jnp.zeros_like(sq_ref)

    s = x_ref[...].astype(jnp.float32) - x0_ref[...]                # (tile_r, S2)
    if need_mask:
        blk = pl.program_id(0) * pl.num_programs(1) + i
        row = blk * tile_r + jax.lax.broadcasted_iota(jnp.int32, (tile_r, 1), 0)
        s = jnp.where(row < n_rows, s, 0.0)
    sum_ref[...] = sum_ref[...] + jnp.sum(s, axis=0, keepdims=True)
    sq_ref[...] = sq_ref[...] + jnp.sum(s * s, axis=0, keepdims=True)


def _scale_shift_kernel(x_ref, scale_ref, shift_ref, o_ref):
    """y = x * scale + shift; (1, S2) scale/shift blocks broadcast over rows."""
    o_ref[...] = (x_ref[...].astype(jnp.float32) * scale_ref[...]
                  + shift_ref[...]).astype(o_ref.dtype)


# ----------------------------------------------------------------------------
# Wrappers
# ----------------------------------------------------------------------------

def _compiler_params(semantics, vmem_limit_bytes):
    return pltpu.CompilerParams(
        dimension_semantics=semantics,
        vmem_limit_bytes=vmem_limit_bytes,
    )


def _bn_fused(xf, w2, b2, eps, fold, s0, n_total, vmem_limit):
    r2, s2 = xf.shape
    return pl.pallas_call(
        functools.partial(_bn_fused_kernel, eps=eps, fold=fold, s0=s0,
                          n_total=n_total),
        out_shape=jax.ShapeDtypeStruct((r2, s2), xf.dtype),
        grid_spec=pltpu.PrefetchScalarGridSpec(
            num_scalar_prefetch=0,
            grid=(1,),
            in_specs=[
                pl.BlockSpec((r2, s2), lambda i: (0, 0)),
                pl.BlockSpec((1, s2), lambda i: (0, 0)),
                pl.BlockSpec((1, s2), lambda i: (0, 0)),
            ],
            out_specs=pl.BlockSpec((r2, s2), lambda i: (0, 0)),
        ),
        compiler_params=_compiler_params(("arbitrary",), vmem_limit),
    )(xf, w2, b2)


def _bn_tiled(xf, w0, b0, eps, fold, s0, n_total, tile_r, num_tc, vmem_limit):
    r2, s2 = xf.shape
    steps_total = pl.cdiv(r2, tile_r)
    # Megacore split of the stats pass on 2-TC chips (v7x / v4 / v5p).
    if num_tc > 1 and steps_total % num_tc == 0 and steps_total >= 2 * num_tc:
        n_splits = num_tc
    else:
        n_splits = 1
    steps = steps_total // n_splits
    need_mask = (r2 % tile_r) != 0

    # Shift reference: row 0 of the slab, also used (bit-identically) in the glue.
    x0 = xf[0:1, :].astype(jnp.float32)                             # (1, S2)

    # Pass 1: shifted per-lane sum / sumsq, per-core accumulators.
    sums8, sqs8 = pl.pallas_call(
        functools.partial(_stats_kernel, tile_r=tile_r, n_rows=r2,
                          need_mask=need_mask),
        out_shape=(
            jax.ShapeDtypeStruct((8 * n_splits, s2), jnp.float32),
            jax.ShapeDtypeStruct((8 * n_splits, s2), jnp.float32),
        ),
        grid_spec=pltpu.PrefetchScalarGridSpec(
            num_scalar_prefetch=0,
            grid=(n_splits, steps),
            in_specs=[
                pl.BlockSpec((tile_r, s2), lambda c, i: (c * steps + i, 0)),
                pl.BlockSpec((1, s2), lambda c, i: (0, 0)),
            ],
            out_specs=(
                pl.BlockSpec((8, s2), lambda c, i: (c, 0)),
                pl.BlockSpec((8, s2), lambda c, i: (c, 0)),
            ),
        ),
        compiler_params=_compiler_params(("parallel", "arbitrary"), vmem_limit),
    )(xf, x0)

    # O(S) glue in plain JAX: combine cores / replicas, fold into scale/shift.
    s_sum = jnp.sum(sums8.reshape(n_splits, 8, s2)[:, 0, :], axis=0, keepdims=True)
    s_sq = jnp.sum(sqs8.reshape(n_splits, 8, s2)[:, 0, :], axis=0, keepdims=True)

    n_lane = float(r2)                               # samples per folded lane
    mean_lane = x0 + s_sum / n_lane                                  # (1, S2)
    m2_lane = s_sq - (s_sum * s_sum) / n_lane        # centered SS per folded lane

    if fold > 1:
        mean_r = mean_lane.reshape(fold, s0)
        m2_r = m2_lane.reshape(fold, s0)
        mean_c = jnp.mean(mean_r, axis=0, keepdims=True)             # (1, S0)
        m2_c = (jnp.sum(m2_r, axis=0, keepdims=True)
                + n_lane * jnp.sum((mean_r - mean_c) ** 2, axis=0, keepdims=True))
    else:
        mean_c, m2_c = mean_lane, m2_lane

    var_c = jnp.maximum(m2_c / float(n_total), 0.0)
    scale_c = w0 * jax.lax.rsqrt(var_c + eps)
    shift_c = b0 - mean_c * scale_c
    scale = jnp.tile(scale_c, (1, fold)) if fold > 1 else scale_c
    shift = jnp.tile(shift_c, (1, fold)) if fold > 1 else shift_c

    # Pass 2: lane-dense, parallel elementwise normalize.
    return pl.pallas_call(
        _scale_shift_kernel,
        out_shape=jax.ShapeDtypeStruct((r2, s2), xf.dtype),
        grid_spec=pltpu.PrefetchScalarGridSpec(
            num_scalar_prefetch=0,
            grid=(steps_total,),
            in_specs=[
                pl.BlockSpec((tile_r, s2), lambda i: (i, 0)),
                pl.BlockSpec((1, s2), lambda i: (0, 0)),
                pl.BlockSpec((1, s2), lambda i: (0, 0)),
            ],
            out_specs=pl.BlockSpec((tile_r, s2), lambda i: (i, 0)),
        ),
        compiler_params=_compiler_params(("parallel",), vmem_limit),
    )(xf, scale, shift)


def batchnorm2d_forward(
    x,
    weight,
    bias,
    *,
    eps=1e-5,
    max_fused_bytes=None,     # override fused/tiled decision (bytes of the input slab)
    vmem_limit_bytes=None,    # override the generation-derived scoped-VMEM limit
    row_tile=None,            # override the tiled-path row tile (testing / tuning)
):
    """Forward pass matching the PyTorch BatchNorm2d module above.

    x:      (d0, d1, *trailing) with trailing[-1] == channels
    weight: (channels,)
    bias:   (channels,)
    """
    assert x.ndim >= 3, "expected at least 3 dims: (d0, d1, ..., channels)"
    trailing = x.shape[2:]
    n_total = int(x.shape[0]) * int(x.shape[1])
    s0 = int(math.prod(trailing))

    budget, auto_limit, num_tc = _tpu_hw_budget()
    vmem_limit = vmem_limit_bytes if vmem_limit_bytes is not None else auto_limit
    if vmem_limit_bytes is not None:
        budget = vmem_limit_bytes

    # Lane folding for narrow trailing sizes: contiguous reshape only.
    fold = _pick_fold(n_total, s0)
    r2, s2 = n_total // fold, fold * s0

    xf = x.reshape(r2, s2)
    w0 = jnp.broadcast_to(weight.astype(jnp.float32), trailing).reshape(1, s0)
    b0 = jnp.broadcast_to(bias.astype(jnp.float32), trailing).reshape(1, s0)

    slab_f32 = r2 * s2 * 4
    in_bytes = r2 * s2 * xf.dtype.itemsize
    if max_fused_bytes is not None:
        use_fused = in_bytes <= max_fused_bytes
    else:
        # Fused footprint ~ pipeline-buffered in + out blocks + f32 temporaries.
        use_fused = 6 * slab_f32 <= budget

    if use_fused:
        w2 = jnp.tile(w0, (1, fold)) if fold > 1 else w0
        b2 = jnp.tile(b0, (1, fold)) if fold > 1 else b0
        y = _bn_fused(xf, w2, b2, eps, fold, s0, n_total, vmem_limit)
    else:
        tile_r = row_tile if row_tile is not None else _pick_row_tile(
            r2, s2, xf.dtype.itemsize, budget)
        y = _bn_tiled(xf, w0, b0, eps, fold, s0, n_total, tile_r, num_tc,
                      vmem_limit)

    return y.reshape(x.shape)


# ----------------------------------------------------------------------------
# Reference + test
# ----------------------------------------------------------------------------

def _reference_forward(x, weight, bias, eps=1e-5):
    """Pure-JAX mirror of the PyTorch forward."""
    denom = x.shape[0] * x.shape[1]
    summ = jnp.sum(x, axis=1, keepdims=True).sum(axis=0, keepdims=True)
    mean = summ / denom
    diff = x - mean
    var = jnp.sum(diff * diff, axis=1, keepdims=True).sum(axis=0, keepdims=True) / denom
    return diff / jnp.sqrt(var + eps) * weight + bias


if __name__ == "__main__":
    key = jax.random.PRNGKey(0)
    k1, k2, k3, k4, k5 = jax.random.split(key, 5)

    # 1) Small (batch, nodes, channels) slab -> fused path; S0=32 is folded
    #    4x into lanes so every load/store is 128-lane dense.
    N, V, C = 8, 16, 32
    x = jax.random.normal(k1, (N, V, C), dtype=jnp.float32)
    weight = 1.0 + 0.1 * jax.random.normal(k2, (C,), dtype=jnp.float32)
    bias = 0.05 * jax.random.normal(k3, (C,), dtype=jnp.float32)
    out = jax.block_until_ready(batchnorm2d_forward(x, weight, bias))
    ref = _reference_forward(x, weight, bias)
    assert out.shape == x.shape
    assert jnp.allclose(out, ref, atol=3e-5, rtol=1e-5), "fused path mismatch"

    # 2) Force the tiled (stats + normalize) path on a 128-lane-aligned slab
    #    with a non-zero mean (exercises the shifted-moments variance).
    x2 = jax.random.normal(k4, (16, 8, 256), dtype=jnp.float32) + 3.0
    w2 = 1.0 + 0.05 * jax.random.normal(k5, (256,), dtype=jnp.float32)
    b2 = jnp.zeros((256,), dtype=jnp.float32)
    out2 = jax.block_until_ready(
        batchnorm2d_forward(x2, w2, b2, max_fused_bytes=0))
    ref2 = _reference_forward(x2, w2, b2)
    assert jnp.allclose(out2, ref2, atol=1e-4, rtol=1e-4), "tiled path mismatch"

    # 3) Tiled path with lane folding and a masked (non-dividing) last row tile.
    x3 = jax.random.normal(k1, (8, 36, 32), dtype=jnp.float32) - 2.0
    out3 = jax.block_until_ready(
        batchnorm2d_forward(x3, weight, bias, max_fused_bytes=0, row_tile=16))
    ref3 = _reference_forward(x3, weight, bias)
    assert jnp.allclose(out3, ref3, atol=1e-4, rtol=1e-4), "masked tiled path mismatch"

    print("KERNEL_OK")
</pallas_src>

<mosaic_0001>
module attributes {stable_mosaic.version = 11 : i64} {
  func.func @_bn_fused_kernel(%arg0: i32, %arg1: memref<32x128xf32, #tpu.memory_space<vmem>>, %arg2: memref<1x128xf32, #tpu.memory_space<vmem>>, %arg3: memref<1x128xf32, #tpu.memory_space<vmem>>, %arg4: memref<32x128xf32, #tpu.memory_space<vmem>>) attributes {dimension_semantics = [#tpu.dimension_semantics<arbitrary>], iteration_bounds = array<i64: 1>, scalar_prefetch = 0 : i64, scratch_operands = 0 : i64, tpu.core_type = #tpu.core_type<tc>, window_params = [{pipeline_mode = #tpu.pipeline_mode<synchronous>, transform_indices = @transform_0, window_bounds = array<i64: 32, 128>}, {pipeline_mode = #tpu.pipeline_mode<synchronous>, transform_indices = @transform_1, window_bounds = array<i64: 1, 128>}, {pipeline_mode = #tpu.pipeline_mode<synchronous>, transform_indices = @transform_2, window_bounds = array<i64: 1, 128>}, {pipeline_mode = #tpu.pipeline_mode<synchronous>, transform_indices = @transform_3, window_bounds = array<i64: 32, 128>}]} {
    %c0 = arith.constant 0 : index
    %c0_0 = arith.constant 0 : index
    %0 = vector.load %arg1[%c0, %c0_0] : memref<32x128xf32, #tpu.memory_space<vmem>>, vector<32x128xf32>
    %cst = arith.constant dense<0.000000e+00> : vector<128xf32>
    %1 = vector.multi_reduction <add>, %0, %cst [0] : vector<32x128xf32> to vector<128xf32>
    %2 = vector.shape_cast %1 : vector<128xf32> to vector<1x128xf32>
    %c32_i32 = arith.constant 32 : i32
    %3 = tpu.dynamic_rotate %2 by %c32_i32 dim 1 : vector<1x128xf32>, i32 -> vector<1x128xf32>
    %4 = arith.addf %2, %3 : vector<1x128xf32>
    %c64_i32 = arith.constant 64 : i32
    %5 = tpu.dynamic_rotate %2 by %c64_i32 dim 1 : vector<1x128xf32>, i32 -> vector<1x128xf32>
    %6 = arith.addf %4, %5 : vector<1x128xf32>
    %c96_i32 = arith.constant 96 : i32
    %7 = tpu.dynamic_rotate %2 by %c96_i32 dim 1 : vector<1x128xf32>, i32 -> vector<1x128xf32>
    %8 = arith.addf %6, %7 : vector<1x128xf32>
    %cst_1 = arith.constant 7.812500e-03 : f32
    %9 = vector.broadcast %cst_1 : f32 to vector<1x128xf32>
    %10 = arith.mulf %8, %9 : vector<1x128xf32>
    %c0_2 = arith.constant 0 : index
    %c0_3 = arith.constant 0 : index
    %11 = vector.load %arg1[%c0_2, %c0_3] : memref<32x128xf32, #tpu.memory_space<vmem>>, vector<32x128xf32>
    %12 = vector.broadcast %10 : vector<1x128xf32> to vector<32x128xf32>
    %13 = arith.subf %11, %12 : vector<32x128xf32>
    %14 = arith.mulf %13, %13 : vector<32x128xf32>
    %cst_4 = arith.constant dense<0.000000e+00> : vector<128xf32>
    %15 = vector.multi_reduction <add>, %14, %cst_4 [0] : vector<32x128xf32> to vector<128xf32>
    %16 = vector.shape_cast %15 : vector<128xf32> to vector<1x128xf32>
    %c32_i32_5 = arith.constant 32 : i32
    %17 = tpu.dynamic_rotate %16 by %c32_i32_5 dim 1 : vector<1x128xf32>, i32 -> vector<1x128xf32>
    %18 = arith.addf %16, %17 : vector<1x128xf32>
    %c64_i32_6 = arith.constant 64 : i32
    %19 = tpu.dynamic_rotate %16 by %c64_i32_6 dim 1 : vector<1x128xf32>, i32 -> vector<1x128xf32>
    %20 = arith.addf %18, %19 : vector<1x128xf32>
    %c96_i32_7 = arith.constant 96 : i32
    %21 = tpu.dynamic_rotate %16 by %c96_i32_7 dim 1 : vector<1x128xf32>, i32 -> vector<1x128xf32>
    %22 = arith.addf %20, %21 : vector<1x128xf32>
    %cst_8 = arith.constant 7.812500e-03 : f32
    %23 = vector.broadcast %cst_8 : f32 to vector<1x128xf32>
    %24 = arith.mulf %22, %23 : vector<1x128xf32>
    %cst_9 = arith.constant 9.99999974E-6 : f32
    %25 = vector.broadcast %cst_9 : f32 to vector<1x128xf32>
    %26 = arith.addf %24, %25 : vector<1x128xf32>
    %27 = math.rsqrt %26 : vector<1x128xf32>
    %c0_10 = arith.constant 0 : index
    %c0_11 = arith.constant 0 : index
    %28 = vector.load %arg2[%c0_10, %c0_11] : memref<1x128xf32, #tpu.memory_space<vmem>>, vector<1x128xf32>
    %29 = arith.mulf %28, %27 : vector<1x128xf32>
    %c0_12 = arith.constant 0 : index
    %c0_13 = arith.constant 0 : index
    %30 = vector.load %arg3[%c0_12, %c0_13] : memref<1x128xf32, #tpu.memory_space<vmem>>, vector<1x128xf32>
    %31 = arith.mulf %10, %29 : vector<1x128xf32>
    %32 = arith.subf %30, %31 : vector<1x128xf32>
    %c0_14 = arith.constant 0 : index
    %c0_15 = arith.constant 0 : index
    %33 = vector.load %arg1[%c0_14, %c0_15] : memref<32x128xf32, #tpu.memory_space<vmem>>, vector<32x128xf32>
    %34 = vector.broadcast %29 : vector<1x128xf32> to vector<32x128xf32>
    %35 = arith.mulf %33, %34 : vector<32x128xf32>
    %36 = vector.broadcast %32 : vector<1x128xf32> to vector<32x128xf32>
    %37 = arith.addf %35, %36 : vector<32x128xf32>
    %c0_16 = arith.constant 0 : index
    %c0_17 = arith.constant 0 : index
    %38 = vector.load %arg4[%c0_16, %c0_17] : memref<32x128xf32, #tpu.memory_space<vmem>>, vector<32x128xf32>
    tpu.vector_store %arg4[%c0_16, %c0_17], %37 {strides = array<i32>} : memref<32x128xf32, #tpu.memory_space<vmem>>, vector<32x128xf32>,
    return
  }
  func.func @transform_0(%arg0: i32) -> (i32, i32) {
    %c0_i32 = arith.constant 0 : i32
    %c0_i32_0 = arith.constant 0 : i32
    %c0_i32_1 = arith.constant 0 : i32
    return %c0_i32, %c0_i32_0 : i32, i32
  }
  func.func @transform_1(%arg0: i32) -> (i32, i32) {
    %c0_i32 = arith.constant 0 : i32
    %c0_i32_0 = arith.constant 0 : i32
    %c0_i32_1 = arith.constant 0 : i32
    return %c0_i32, %c0_i32_0 : i32, i32
  }
  func.func @transform_2(%arg0: i32) -> (i32, i32) {
    %c0_i32 = arith.constant 0 : i32
    %c0_i32_0 = arith.constant 0 : i32
    %c0_i32_1 = arith.constant 0 : i32
    return %c0_i32, %c0_i32_0 : i32, i32
  }
  func.func @transform_3(%arg0: i32) -> (i32, i32) {
    %c0_i32 = arith.constant 0 : i32
    %c0_i32_0 = arith.constant 0 : i32
    %c0_i32_1 = arith.constant 0 : i32
    return %c0_i32, %c0_i32_0 : i32, i32
  }
}

</mosaic_0001>

<llo_original>
// kernel: tpu_custom_call.1
$region0: #{tpu_custom_call.1}
  #allocation0 [shape = 'u32[]', space=smem, size = 0x4, offset = 0x4, fixed_abs, tag = 'smem constant byte address 0x4 - core index']
  #allocation1 [shape = 'u32[72,128]{1,0:T(1,128)}', space=vmem, size = 0x9000, scoped, tag = 'internal scratch']
  %s0 = inlined_call_operand.hbm [shape: f32[32,128], index: 0, kind: input, shape index: {}]
  %s1 = inlined_call_operand.hbm [shape: f32[1,128], index: 1, kind: input, shape index: {}]
  %s2 = inlined_call_operand.vmem [shape: f32[1,128], index: 2, kind: input, shape index: {}]
  %s3 = inlined_call_operand.hbm [shape: f32[32,128], index: 3, kind: output, shape index: {}]
  %s4 = sld [smem:[#allocation0]]
  $region30: #{tpu_custom_call.1} parent=0
    _
  %s6 = ssub.s32 1, %s4
  %s7 = scalar_select 0, %s6, %s4
  $region1: #{tpu_custom_call.1} parent=0
    #allocation2 [shape = 'u8[16384]{0}', space=vmem, size = 0x4000, scoped, tag = 'input window, operand 0, single buffered']
    #allocation3 [shape = 's32[1]{0}', space=sflag, size = 0x4, scoped, tag = 'scoped memory for tpu_custom_call.1']
    #allocation4 [shape = 's32[1]{0}', space=sflag, size = 0x4, scoped, tag = 'scoped memory for tpu_custom_call.1']
    #allocation5 [shape = 'u8[512]{0}', space=vmem, size = 0x400, scoped, tag = 'input window, operand 1, single buffered']
    #allocation6 [shape = 's32[1]{0}', space=sflag, size = 0x4, scoped, tag = 'scoped memory for tpu_custom_call.1']
    #allocation7 [shape = 'u8[16384]{0}', space=vmem, size = 0x4000, scoped, tag = 'output window, operand 0, single buffered']
    %8 = vsyncpa [#allocation3], 0
    %9 = vsyncpa [#allocation6], 0
    %10 = vsyncpa [#allocation4], 0
    // Predicated region
    $region2: #{tpu_custom_call.1} parent=1 // pred_check
      _
    $region3: #{tpu_custom_call.1} parent=1 // pred_check_branch
      %12 = sbr.rel (0) target = $region5
    $region4: #{tpu_custom_call.1} parent=1 // pred_region
      %14 = vsyncadd [#allocation3], 0
      %s15 = sshll.u32 %s0, 4
      %s16 = int_to_ptr.hbm [resolvable:$true] %s15
      %s17 = sshll.u32 [#allocation2], 4
      %s18 = int_to_ptr.vmem [resolvable:$true] %s17
      %23 = dma.hbm_to_vmem [thread:$0]  %s16, 512, %s18, [#allocation3], 128, 128, 8
    $region5: #{tpu_custom_call.1} parent=1 // pred_fallthru
      _
    // Predicated region
    $region6: #{tpu_custom_call.1} parent=1 // pred_check
      _
    $region7: #{tpu_custom_call.1} parent=1 // pred_check_branch
      %25 = sbr.rel (0) target = $region9
    $region8: #{tpu_custom_call.1} parent=1 // pred_region
      %27 = vsyncadd [#allocation6], 0
      %s29 = sshll.u32 %s1, 4
      %s30 = int_to_ptr.hbm [resolvable:$true] %s29
      %s31 = sshll.u32 [#allocation5], 4
      %s32 = int_to_ptr.vmem [resolvable:$true] %s31
      %34 = dma.hbm_to_vmem [thread:$0]  %s30, 16, %s32, [#allocation6]
    $region9: #{tpu_custom_call.1} parent=1 // pred_fallthru
      _
    // Predicated region
    $region10: #{tpu_custom_call.1} parent=1 // pred_check
      _
    $region11: #{tpu_custom_call.1} parent=1 // pred_check_branch
      %36 = sbr.rel (0) target = $region13
    $region12: #{tpu_custom_call.1} parent=1 // pred_region
      _
    $region13: #{tpu_custom_call.1} parent=1 // pred_fallthru
      _
    // Predicated region
    $region14: #{tpu_custom_call.1} parent=1 // pred_check
      _
    $region15: #{tpu_custom_call.1} parent=1 // pred_check_branch
      %38 = sbr.rel (0) target = $region17
    $region16: #{tpu_custom_call.1} parent=1 // pred_region
      %40 = dma.done [#allocation3], 512
    $region17: #{tpu_custom_call.1} parent=1 // pred_fallthru
      _
    // Predicated region
    $region18: #{tpu_custom_call.1} parent=1 // pred_check
      _
    $region19: #{tpu_custom_call.1} parent=1 // pred_check_branch
      %42 = sbr.rel (0) target = $region21
    $region20: #{tpu_custom_call.1} parent=1 // pred_region
      %44 = dma.done [#allocation6], 16
    $region21: #{tpu_custom_call.1} parent=1 // pred_fallthru
      _
    %v45 = vld [vmem:[#allocation2] sm:$0xff]
    %v46 = vld [vmem:[#allocation2 + $0x8] sm:$0xff]
    %v47 = vld [vmem:[#allocation2 + $0x10] sm:$0xff]
    %v48 = vld [vmem:[#allocation2 + $0x18] sm:$0xff]
    %v49 = vadd.f32 %v45, %v46
    %v50 = vadd.f32 %v49, %v47
    %v51 = vadd.f32 %v50, %v48
    %v52 = vrot.slane %v51, 4
    %v53 = vadd.f32 %v51, %v52
    %v54 = vrot.slane %v53, 2
    %v55 = vadd.f32 %v53, %v54
    %v56 = vrot.slane %v55, 1
    %v57 = vadd.f32 %v55, %v56
    %58 = vrot.lane.b32.xlu0 %v57, 32
    %v59 = vpop.permute.xlu0 %58
    %v60 = vadd.f32 %v57, %v59
    %61 = vrot.lane.b32.xlu0 %v57, 64
    %v62 = vpop.permute.xlu0 %61
    %v63 = vadd.f32 %v60, %v62
    %64 = vrot.lane.b32.xlu0 %v57, 96
    %v65 = vpop.permute.xlu0 %64
    %v66 = vadd.f32 %v63, %v65
    %v67 = vmul.f32 %v66, 0.0078125
    %v68 = vperm.slane %v67, 0
    %v69 = vsub.f32 %v45, %v68
    %v70 = vsub.f32 %v46, %v68
    %v71 = vsub.f32 %v47, %v68
    %v72 = vsub.f32 %v48, %v68
    %v73 = vmul.f32 %v69, %v69
    %v74 = vmul.f32 %v70, %v70
    %v75 = vmul.f32 %v71, %v71
    %v76 = vmul.f32 %v72, %v72
    %v77 = vadd.f32 %v73, %v74
    %v78 = vadd.f32 %v77, %v75
    %v79 = vadd.f32 %v78, %v76
    %v80 = vrot.slane %v79, 4
    %v81 = vadd.f32 %v79, %v80
    %v82 = vrot.slane %v81, 2
    %v83 = vadd.f32 %v81, %v82
    %v84 = vrot.slane %v83, 1
    %v85 = vadd.f32 %v83, %v84
    %86 = vrot.lane.b32.xlu0 %v85, 32
    %v87 = vpop.permute.xlu0 %86
    %v88 = vadd.f32 %v85, %v87
    %89 = vrot.lane.b32.xlu0 %v85, 64
    %v90 = vpop.permute.xlu0 %89
    %v91 = vadd.f32 %v88, %v90
    %92 = vrot.lane.b32.xlu0 %v85, 96
    %v93 = vpop.permute.xlu0 %92
    %v94 = vadd.f32 %v91, %v93
    %v95 = vmul.f32 %v94, 0.0078125
    %v96 = vadd.f32 %v95, 1e-05
    %v97 = vrsqrt.pop %v96
    %v98 = vmul.f32 %v97, %v96
    %v99 = vmul.f32 %v98, %v97
    %v100 = vmul.f32 0.5, %v99
    %v101 = vsub.f32 1.5, %v100
    %v102 = vmul.f32 %v97, %v101
    %vm103 = vweird.f32 %v96
    %vm104 = vweird.f32 %v97
    %vm105 = vmor %vm103, %vm104
    %v106 = vsel %vm105, %v97, %v102
    %v107 = vld [vmem:[#allocation5] sm:$0x1]
    %v108 = vmul.f32 %v107, %v106
    %v109 = vld [vmem:[%s2] sm:$0x1]
    %v110 = vmul.f32 %v67, %v108
    %v111 = vsub.f32 %v109, %v110
    %v113 = vperm.slane %v108, 0
    %v115 = vmul.f32 %v45, %v113
    %v116 = vmul.f32 %v46, %v113
    %v117 = vmul.f32 %v47, %v113
    %v118 = vmul.f32 %v48, %v113
    %v120 = vperm.slane %v111, 0
    %v122 = vadd.f32 %v115, %v120
    %v123 = vadd.f32 %v116, %v120
    %v124 = vadd.f32 %v117, %v120
    %v125 = vadd.f32 %v118, %v120
    %126 = vst [vmem:[#allocation7] sm:$0xff] %v122
    %127 = vst [vmem:[#allocation7 + $0x8] sm:$0xff] %v123
    %128 = vst [vmem:[#allocation7 + $0x10] sm:$0xff] %v124
    %129 = vst [vmem:[#allocation7 + $0x18] sm:$0xff] %v125
    // Predicated region
    $region22: #{tpu_custom_call.1} parent=1 // pred_check
      _
    $region23: #{tpu_custom_call.1} parent=1 // pred_check_branch
      %131 = sbr.rel (0) target = $region25
    $region24: #{tpu_custom_call.1} parent=1 // pred_region
      %133 = vsyncadd [#allocation4], 0
      %s134 = sshll.u32 [#allocation7], 4
      %s135 = int_to_ptr.vmem [resolvable:$true] %s134
      %s136 = sshll.u32 %s3, 4
      %s137 = int_to_ptr.hbm [resolvable:$true] %s136
      %142 = dma.vmem_to_hbm [thread:$0]  %s135, 512, %s137, [#allocation4], 128, 128, 8
    $region25: #{tpu_custom_call.1} parent=1 // pred_fallthru
      _
    // Predicated region
    $region26: #{tpu_custom_call.1} parent=1 // pred_check
      _
    $region27: #{tpu_custom_call.1} parent=1 // pred_check_branch
      %144 = sbr.rel (0) target = $region29
    $region28: #{tpu_custom_call.1} parent=1 // pred_region
      %146 = dma.done [#allocation4], 512
    $region29: #{tpu_custom_call.1} parent=1 // pred_fallthru
      _
    %147 = vsyncpa [#allocation3], 1
    %148 = vsyncpa [#allocation6], 1
    %149 = vsyncpa [#allocation4], 1

</llo_original>
